<compile_context>
chip_gen: v6e
topology: v6e:2x2x1
jax: 0.10.0
libtpu: 0.0.40
codegen_flags: <defaults>
</compile_context>

<pallas_src>
import functools

import jax
import jax.numpy as jnp
from jax import lax
from jax.experimental import pallas as pl
from jax.experimental.pallas import tpu as pltpu

LANES = 128
MAX_TILE_R = 4096            # (4096, 128) f32 block = 2 MiB per input per step
ACC_R = 256                  # fixed accumulator height (decoupled from tile_r)
VMEM_LIMIT_BYTES = 32 * 1024 * 1024   # explicit scoped-VMEM headroom (v5e default: 16 MiB)


def _num_tensorcores():
    """Best-effort TensorCores-per-chip count (2 on v7x, 1 on v5e/v6e)."""
    try:
        info = pltpu.get_tpu_info()
    except Exception:
        return 1
    for name in ("num_cores", "core_count", "num_tensorcores",
                 "tensorcore_count", "cores_per_chip", "num_tensor_cores"):
        v = getattr(info, name, None)
        if isinstance(v, int) and 1 <= v <= 16:
            return v
    return 1


def _silog_partial_kernel(pred_ref, gt_ref, out_ref,
                          acc_d_ref, acc_d2_ref, acc_cnt_ref, *,
                          valid_rows, acc_r, n_chunks):
    """Accumulate masked sum(d), sum(d^2) and valid-count for one split.

    pred_ref, gt_ref : (tile_r, 128) input tiles (native dtype)
    out_ref          : (1, 3, 128) f32 per-split lane-wise partial sums
    acc_*_ref        : (acc_r, 128) f32 VMEM accumulators, acc_r*n_chunks == tile_r
    """
    s = pl.program_id(0)           # core split (leading axis)
    i = pl.program_id(1)           # streaming step within split
    n_inner = pl.num_programs(1)
    tile_r = acc_r * n_chunks

    @pl.when(i == 0)
    def _():
        acc_d_ref[...] = jnp.zeros_like(acc_d_ref)
        acc_d2_ref[...] = jnp.zeros_like(acc_d2_ref)
        acc_cnt_ref[...] = jnp.zeros_like(acc_cnt_ref)

    # Intended block index (may have been clamped by the index_map).  Any block
    # that was clamped or overlaps the ragged tail takes the masked slow path.
    block_idx = s * n_inner + i
    row0 = block_idx * tile_r

    def accumulate(mask_fn):
        def body(c, carry):
            off = pl.multiple_of(c * acc_r, acc_r)
            pred = pred_ref[pl.ds(off, acc_r), :].astype(jnp.float32)
            gt = gt_ref[pl.ds(off, acc_r), :].astype(jnp.float32)
            mask = mask_fn(gt, off)
            # Select discards NaN/-inf from log of invalid/pad values, so
            # masked-out elements contribute exactly zero (no extra selects).
            # NOTE(v7x): if the bundle dump shows EUP binding, evaluate
            # log(pred * pl.reciprocal(gt)) instead to trade EUP for VPU work.
            d = jnp.where(mask, jnp.log(pred) - jnp.log(gt), 0.0)
            acc_d_ref[...] += d
            acc_d2_ref[...] += d * d
            acc_cnt_ref[...] += mask.astype(jnp.float32)
            return carry
        lax.fori_loop(0, n_chunks, body, 0, unroll=True)

    is_interior = (row0 + tile_r) <= valid_rows

    @pl.when(is_interior)
    def _():
        # Fast path: every row of this block is in range -> no iota/row mask.
        accumulate(lambda gt, off: jnp.logical_and(gt > 0.0, gt < 1.0))

    @pl.when(jnp.logical_not(is_interior))
    def _():
        # Tail / clamped-duplicate block: also mask rows past the valid range
        # (covers the partially-DMA'd last HBM block and duplicated blocks, so
        # uninitialized VMEM pad data never contributes).
        def tail_mask(gt, off):
            row_ids = (lax.broadcasted_iota(jnp.int32, (acc_r, LANES), 0)
                       + (row0 + off))
            return jnp.logical_and(jnp.logical_and(gt > 0.0, gt < 1.0),
                                   row_ids < valid_rows)
        accumulate(tail_mask)

    @pl.when(i == n_inner - 1)
    def _():
        # Direct row writes (no concatenate relayout); one-time epilogue.
        out_ref[0, pl.ds(0, 1), :] = jnp.sum(acc_d_ref[...], axis=0, keepdims=True)
        out_ref[0, pl.ds(1, 1), :] = jnp.sum(acc_d2_ref[...], axis=0, keepdims=True)
        out_ref[0, pl.ds(2, 1), :] = jnp.sum(acc_cnt_ref[...], axis=0, keepdims=True)


def scale_invariant_log_loss(depth_pred, depth_gt, variance_focus=0.85):
    pred = jnp.squeeze(depth_pred, axis=1)       # (N, H, W), keep native dtype
    gt = depth_gt

    total = pred.size
    pad = (-total) % LANES                       # pad to a whole 128-lane row
    pred_flat = pred.reshape(-1)
    gt_flat = gt.reshape(-1)
    if pad:
        pred_flat = jnp.pad(pred_flat, (0, pad), constant_values=1)
        gt_flat = jnp.pad(gt_flat, (0, pad), constant_values=0)   # 0 => invalid

    rows = (total + pad) // LANES
    pred2d = pred_flat.reshape(rows, LANES)
    gt2d = gt_flat.reshape(rows, LANES)

    # Tile rows: full array if it fits in one block (always layout-legal),
    # else 4096-row streaming tiles with fixed 256-row accumulators.
    if rows <= MAX_TILE_R:
        tile_r, acc_r, n_chunks = rows, rows, 1
    else:
        tile_r, acc_r, n_chunks = MAX_TILE_R, ACC_R, MAX_TILE_R // ACC_R

    num_blocks = pl.cdiv(rows, tile_r)
    num_cores = _num_tensorcores()
    num_splits = num_cores if (num_cores > 1 and num_blocks >= num_cores) else 1
    steps = pl.cdiv(num_blocks, num_splits)

    def in_index_map(s, i):
        # Clamp so the DMA never targets a fully out-of-range block; the
        # in-kernel tail path zeroes any clamped/duplicated contribution.
        return (jnp.minimum(s * steps + i, num_blocks - 1), 0)

    kernel = functools.partial(_silog_partial_kernel, valid_rows=rows,
                               acc_r=acc_r, n_chunks=n_chunks)

    def run(dim_semantics):
        # NOTE: for very short streams on v6e, pipeline_mode=pl.Buffered(3) on
        # the input specs is a candidate sweep (not enabled by default).
        return pl.pallas_call(
            kernel,
            out_shape=jax.ShapeDtypeStruct((num_splits, 3, LANES), jnp.float32),
            grid_spec=pltpu.PrefetchScalarGridSpec(
                num_scalar_prefetch=0,
                grid=(num_splits, steps),
                in_specs=[
                    pl.BlockSpec((tile_r, LANES), in_index_map),
                    pl.BlockSpec((tile_r, LANES), in_index_map),
                ],
                out_specs=pl.BlockSpec((1, 3, LANES), lambda s, i: (s, 0, 0)),
                scratch_shapes=[
                    pltpu.VMEM((acc_r, LANES), jnp.float32),
                    pltpu.VMEM((acc_r, LANES), jnp.float32),
                    pltpu.VMEM((acc_r, LANES), jnp.float32),
                ],
            ),
            compiler_params=pltpu.CompilerParams(
                dimension_semantics=dim_semantics,
                vmem_limit_bytes=VMEM_LIMIT_BYTES,
            ),
        )(pred2d, gt2d)

    if num_splits > 1 and hasattr(pltpu, "CORE_PARALLEL"):
        # Shard the leading axis across TensorCores on multi-TC chips (v7x).
        try:
            partials = run((pltpu.CORE_PARALLEL, pltpu.ARBITRARY))
        except Exception:
            partials = run(("parallel", "arbitrary"))
    elif num_splits > 1:
        partials = run(("parallel", "arbitrary"))
    else:
        partials = run(("arbitrary", "arbitrary"))

    sum_d = jnp.sum(partials[:, 0, :])
    sum_d2 = jnp.sum(partials[:, 1, :])
    cnt = jnp.sum(partials[:, 2, :])

    # Like the PyTorch reference, an empty valid mask (cnt == 0) yields NaN;
    # that degenerate behaviour is intentionally preserved.
    mean_d = sum_d / cnt
    mean_d2 = sum_d2 / cnt
    # Clamp: fp rounding can make the sqrt argument slightly negative when the
    # variance term nearly cancels.
    return jnp.sqrt(jnp.maximum(mean_d2 - variance_focus * mean_d * mean_d,
                                0.0)) * 10.0


def _reference_loss(depth_pred, depth_gt, variance_focus=0.85):
    pred = jnp.squeeze(depth_pred, axis=1).astype(jnp.float32)
    gt = depth_gt.astype(jnp.float32)
    mask = jnp.logical_and(gt > 0.0, gt < 1.0)
    d = jnp.where(mask,
                  jnp.log(jnp.where(mask, pred, 1.0))
                  - jnp.log(jnp.where(mask, gt, 1.0)), 0.0)
    cnt = jnp.sum(mask)
    mean_d = jnp.sum(d) / cnt
    mean_d2 = jnp.sum(d * d) / cnt
    return jnp.sqrt(mean_d2 - variance_focus * mean_d ** 2) * 10.0


if __name__ == "__main__":
    key = jax.random.PRNGKey(0)

    # Cases: spec-sized small map; a larger map that exercises MAX_TILE_R
    # tiles, the chunked accumulators and the ragged (partially-DMA'd) tail
    # block; an odd shape exercising the <128-element pad path; and a bf16
    # case exercising native-dtype streaming (half the HBM bytes).
    cases = [
        ((2, 16, 16), jnp.float32),
        ((2, 512, 640), jnp.float32),
        ((1, 17, 23), jnp.float32),
        ((2, 512, 640), jnp.bfloat16),
    ]
    for idx, ((N, H, W), dtype) in enumerate(cases):
        k1, k2 = jax.random.split(jax.random.fold_in(key, idx))
        depth_pred = jax.random.uniform(k1, (N, 1, H, W), jnp.float32,
                                        minval=0.1, maxval=2.0).astype(dtype)
        depth_gt = jax.random.uniform(k2, (N, H, W), jnp.float32,
                                      minval=-0.2, maxval=1.3).astype(dtype)

        loss = scale_invariant_log_loss(depth_pred, depth_gt, 0.85)
        loss = jax.block_until_ready(loss)
        ref = _reference_loss(depth_pred, depth_gt, 0.85)
        assert jnp.allclose(loss, ref, rtol=1e-4, atol=1e-5), (
            (N, H, W), str(dtype), loss, ref)

    print("KERNEL_OK")
</pallas_src>

<mosaic_0001>
module attributes {stable_mosaic.version = 11 : i64} {
  func.func @_silog_partial_kernel(%arg0: i32, %arg1: i32, %arg2: memref<4x128xf32, #tpu.memory_space<vmem>>, %arg3: memref<4x128xf32, #tpu.memory_space<vmem>>, %arg4: memref<1x3x128xf32, #tpu.memory_space<vmem>>, %arg5: memref<4x128xf32, #tpu.memory_space<vmem>>, %arg6: memref<4x128xf32, #tpu.memory_space<vmem>>, %arg7: memref<4x128xf32, #tpu.memory_space<vmem>>) attributes {dimension_semantics = [#tpu.dimension_semantics<arbitrary>, #tpu.dimension_semantics<arbitrary>], iteration_bounds = array<i64: 1, 1>, scalar_prefetch = 0 : i64, scratch_operands = 3 : i64, tpu.core_type = #tpu.core_type<tc>, window_params = [{transform_indices = @transform_0, window_bounds = array<i64: 4, 128>}, {transform_indices = @transform_1, window_bounds = array<i64: 4, 128>}, {transform_indices = @transform_2, window_bounds = array<i64: 1, 3, 128>}]} {
    %c0_i32 = arith.constant 0 : i32
    %0 = arith.cmpi eq, %arg1, %c0_i32 : i32
    %1 = arith.extui %0 : i1 to i32
    %c0_i32_0 = arith.constant 0 : i32
    %2 = arith.cmpi ne, %1, %c0_i32_0 : i32
    scf.if %2 {
      %cst = arith.constant 0.000000e+00 : f32
      %16 = vector.broadcast %cst : f32 to vector<4x128xf32>
      %c0 = arith.constant 0 : index
      %c0_7 = arith.constant 0 : index
      %17 = vector.load %arg5[%c0, %c0_7] : memref<4x128xf32, #tpu.memory_space<vmem>>, vector<4x128xf32>
      tpu.vector_store %arg5[%c0, %c0_7], %16 {strides = array<i32>} : memref<4x128xf32, #tpu.memory_space<vmem>>, vector<4x128xf32>,
      %cst_8 = arith.constant 0.000000e+00 : f32
      %18 = vector.broadcast %cst_8 : f32 to vector<4x128xf32>
      %c0_9 = arith.constant 0 : index
      %c0_10 = arith.constant 0 : index
      %19 = vector.load %arg6[%c0_9, %c0_10] : memref<4x128xf32, #tpu.memory_space<vmem>>, vector<4x128xf32>
      tpu.vector_store %arg6[%c0_9, %c0_10], %18 {strides = array<i32>} : memref<4x128xf32, #tpu.memory_space<vmem>>, vector<4x128xf32>,
      %cst_11 = arith.constant 0.000000e+00 : f32
      %20 = vector.broadcast %cst_11 : f32 to vector<4x128xf32>
      %c0_12 = arith.constant 0 : index
      %c0_13 = arith.constant 0 : index
      %21 = vector.load %arg7[%c0_12, %c0_13] : memref<4x128xf32, #tpu.memory_space<vmem>>, vector<4x128xf32>
      tpu.vector_store %arg7[%c0_12, %c0_13], %20 {strides = array<i32>} : memref<4x128xf32, #tpu.memory_space<vmem>>, vector<4x128xf32>,
    } else {
    }
    %c1_i32 = arith.constant 1 : i32
    %3 = arith.muli %arg0, %c1_i32 : i32
    %4 = arith.addi %3, %arg1 : i32
    %c4_i32 = arith.constant 4 : i32
    %5 = arith.muli %4, %c4_i32 : i32
    %c4_i32_1 = arith.constant 4 : i32
    %6 = arith.addi %5, %c4_i32_1 : i32
    %c4_i32_2 = arith.constant 4 : i32
    %7 = arith.cmpi sle, %6, %c4_i32_2 : i32
    %8 = arith.extui %7 : i1 to i32
    %c0_i32_3 = arith.constant 0 : i32
    %9 = arith.cmpi ne, %8, %c0_i32_3 : i32
    scf.if %9 {
      %c0_i32_7 = arith.constant 0 : i32
      %c4_i32_8 = arith.constant 4 : i32
      %16 = arith.muli %c0_i32_7, %c4_i32_8 : i32
      %17 = tpu.assume_multiple %16, 4 : i32
      %18 = arith.index_cast %17 : i32 to index
      %c0 = arith.constant 0 : index
      %19 = vector.load %arg2[%18, %c0] : memref<4x128xf32, #tpu.memory_space<vmem>>, vector<4x128xf32>
      %20 = arith.index_cast %17 : i32 to index
      %c0_9 = arith.constant 0 : index
      %21 = vector.load %arg3[%20, %c0_9] : memref<4x128xf32, #tpu.memory_space<vmem>>, vector<4x128xf32>
      %cst = arith.constant 0.000000e+00 : f32
      %22 = vector.broadcast %cst : f32 to vector<4x128xf32>
      %23 = arith.cmpf ogt, %21, %22 : vector<4x128xf32>
      %cst_10 = arith.constant 1.000000e+00 : f32
      %24 = vector.broadcast %cst_10 : f32 to vector<4x128xf32>
      %25 = arith.cmpf olt, %21, %24 : vector<4x128xf32>
      %26 = arith.andi %23, %25 : vector<4x128xi1>
      %27 = math.log %19 : vector<4x128xf32>
      %28 = math.log %21 : vector<4x128xf32>
      %29 = arith.subf %27, %28 : vector<4x128xf32>
      %cst_11 = arith.constant 0.000000e+00 : f32
      %30 = vector.broadcast %cst_11 : f32 to vector<4x128xf32>
      %31 = arith.select %26, %29, %30 : vector<4x128xi1>, vector<4x128xf32>
      %c0_12 = arith.constant 0 : index
      %c0_13 = arith.constant 0 : index
      %32 = vector.load %arg5[%c0_12, %c0_13] : memref<4x128xf32, #tpu.memory_space<vmem>>, vector<4x128xf32>
      %33 = arith.addf %32, %31 : vector<4x128xf32>
      %c0_14 = arith.constant 0 : index
      %c0_15 = arith.constant 0 : index
      %34 = vector.load %arg5[%c0_14, %c0_15] : memref<4x128xf32, #tpu.memory_space<vmem>>, vector<4x128xf32>
      tpu.vector_store %arg5[%c0_14, %c0_15], %33 {strides = array<i32>} : memref<4x128xf32, #tpu.memory_space<vmem>>, vector<4x128xf32>,
      %c0_16 = arith.constant 0 : index
      %c0_17 = arith.constant 0 : index
      %35 = vector.load %arg6[%c0_16, %c0_17] : memref<4x128xf32, #tpu.memory_space<vmem>>, vector<4x128xf32>
      %36 = arith.mulf %31, %31 : vector<4x128xf32>
      %37 = arith.addf %35, %36 : vector<4x128xf32>
      %c0_18 = arith.constant 0 : index
      %c0_19 = arith.constant 0 : index
      %38 = vector.load %arg6[%c0_18, %c0_19] : memref<4x128xf32, #tpu.memory_space<vmem>>, vector<4x128xf32>
      tpu.vector_store %arg6[%c0_18, %c0_19], %37 {strides = array<i32>} : memref<4x128xf32, #tpu.memory_space<vmem>>, vector<4x128xf32>,
      %c0_20 = arith.constant 0 : index
      %c0_21 = arith.constant 0 : index
      %39 = vector.load %arg7[%c0_20, %c0_21] : memref<4x128xf32, #tpu.memory_space<vmem>>, vector<4x128xf32>
      %40 = arith.extui %26 : vector<4x128xi1> to vector<4x128xi32>
      %41 = arith.sitofp %40 : vector<4x128xi32> to vector<4x128xf32>
      %42 = arith.addf %39, %41 : vector<4x128xf32>
      %c0_22 = arith.constant 0 : index
      %c0_23 = arith.constant 0 : index
      %43 = vector.load %arg7[%c0_22, %c0_23] : memref<4x128xf32, #tpu.memory_space<vmem>>, vector<4x128xf32>
      tpu.vector_store %arg7[%c0_22, %c0_23], %42 {strides = array<i32>} : memref<4x128xf32, #tpu.memory_space<vmem>>, vector<4x128xf32>,
      %c1_i32_24 = arith.constant 1 : i32
    } else {
    }
    %true = arith.constant true
    %10 = arith.xori %7, %true : i1
    %11 = arith.extui %10 : i1 to i32
    %c0_i32_4 = arith.constant 0 : i32
    %12 = arith.cmpi ne, %11, %c0_i32_4 : i32
    scf.if %12 {
      %c0_i32_7 = arith.constant 0 : i32
      %c4_i32_8 = arith.constant 4 : i32
      %16 = arith.muli %c0_i32_7, %c4_i32_8 : i32
      %17 = tpu.assume_multiple %16, 4 : i32
      %18 = arith.index_cast %17 : i32 to index
      %c0 = arith.constant 0 : index
      %19 = vector.load %arg2[%18, %c0] : memref<4x128xf32, #tpu.memory_space<vmem>>, vector<4x128xf32>
      %20 = arith.index_cast %17 : i32 to index
      %c0_9 = arith.constant 0 : index
      %21 = vector.load %arg3[%20, %c0_9] : memref<4x128xf32, #tpu.memory_space<vmem>>, vector<4x128xf32>
      %22 = tpu.iota {dimensions = array<i32: 0>} : vector<4x128xi32>
      %23 = arith.addi %5, %17 : i32
      %24 = vector.broadcast %23 : i32 to vector<4x128xi32>
      %25 = arith.addi %22, %24 : vector<4x128xi32>
      %cst = arith.constant 0.000000e+00 : f32
      %26 = vector.broadcast %cst : f32 to vector<4x128xf32>
      %27 = arith.cmpf ogt, %21, %26 : vector<4x128xf32>
      %cst_10 = arith.constant 1.000000e+00 : f32
      %28 = vector.broadcast %cst_10 : f32 to vector<4x128xf32>
      %29 = arith.cmpf olt, %21, %28 : vector<4x128xf32>
      %30 = arith.andi %27, %29 : vector<4x128xi1>
      %c4_i32_11 = arith.constant 4 : i32
      %31 = vector.broadcast %c4_i32_11 : i32 to vector<4x128xi32>
      %32 = arith.cmpi slt, %25, %31 : vector<4x128xi32>
      %33 = arith.andi %30, %32 : vector<4x128xi1>
      %34 = math.log %19 : vector<4x128xf32>
      %35 = math.log %21 : vector<4x128xf32>
      %36 = arith.subf %34, %35 : vector<4x128xf32>
      %cst_12 = arith.constant 0.000000e+00 : f32
      %37 = vector.broadcast %cst_12 : f32 to vector<4x128xf32>
      %38 = arith.select %33, %36, %37 : vector<4x128xi1>, vector<4x128xf32>
      %c0_13 = arith.constant 0 : index
      %c0_14 = arith.constant 0 : index
      %39 = vector.load %arg5[%c0_13, %c0_14] : memref<4x128xf32, #tpu.memory_space<vmem>>, vector<4x128xf32>
      %40 = arith.addf %39, %38 : vector<4x128xf32>
      %c0_15 = arith.constant 0 : index
      %c0_16 = arith.constant 0 : index
      %41 = vector.load %arg5[%c0_15, %c0_16] : memref<4x128xf32, #tpu.memory_space<vmem>>, vector<4x128xf32>
      tpu.vector_store %arg5[%c0_15, %c0_16], %40 {strides = array<i32>} : memref<4x128xf32, #tpu.memory_space<vmem>>, vector<4x128xf32>,
      %c0_17 = arith.constant 0 : index
      %c0_18 = arith.constant 0 : index
      %42 = vector.load %arg6[%c0_17, %c0_18] : memref<4x128xf32, #tpu.memory_space<vmem>>, vector<4x128xf32>
      %43 = arith.mulf %38, %38 : vector<4x128xf32>
      %44 = arith.addf %42, %43 : vector<4x128xf32>
      %c0_19 = arith.constant 0 : index
      %c0_20 = arith.constant 0 : index
      %45 = vector.load %arg6[%c0_19, %c0_20] : memref<4x128xf32, #tpu.memory_space<vmem>>, vector<4x128xf32>
      tpu.vector_store %arg6[%c0_19, %c0_20], %44 {strides = array<i32>} : memref<4x128xf32, #tpu.memory_space<vmem>>, vector<4x128xf32>,
      %c0_21 = arith.constant 0 : index
      %c0_22 = arith.constant 0 : index
      %46 = vector.load %arg7[%c0_21, %c0_22] : memref<4x128xf32, #tpu.memory_space<vmem>>, vector<4x128xf32>
      %47 = arith.extui %33 : vector<4x128xi1> to vector<4x128xi32>
      %48 = arith.sitofp %47 : vector<4x128xi32> to vector<4x128xf32>
      %49 = arith.addf %46, %48 : vector<4x128xf32>
      %c0_23 = arith.constant 0 : index
      %c0_24 = arith.constant 0 : index
      %50 = vector.load %arg7[%c0_23, %c0_24] : memref<4x128xf32, #tpu.memory_space<vmem>>, vector<4x128xf32>
      tpu.vector_store %arg7[%c0_23, %c0_24], %49 {strides = array<i32>} : memref<4x128xf32, #tpu.memory_space<vmem>>, vector<4x128xf32>,
      %c1_i32_25 = arith.constant 1 : i32
    } else {
    }
    %c0_i32_5 = arith.constant 0 : i32
    %13 = arith.cmpi eq, %arg1, %c0_i32_5 : i32
    %14 = arith.extui %13 : i1 to i32
    %c0_i32_6 = arith.constant 0 : i32
    %15 = arith.cmpi ne, %14, %c0_i32_6 : i32
    scf.if %15 {
      %c0 = arith.constant 0 : index
      %c0_7 = arith.constant 0 : index
      %16 = vector.load %arg5[%c0, %c0_7] : memref<4x128xf32, #tpu.memory_space<vmem>>, vector<4x128xf32>
      %cst = arith.constant dense<0.000000e+00> : vector<128xf32>
      %17 = vector.multi_reduction <add>, %16, %cst [0] : vector<4x128xf32> to vector<128xf32>
      %18 = vector.shape_cast %17 : vector<128xf32> to vector<1x128xf32>
      %c0_8 = arith.constant 0 : index
      %c0_9 = arith.constant 0 : index
      %c0_10 = arith.constant 0 : index
      %19 = vector.load %arg4[%c0_8, %c0_9, %c0_10] : memref<1x3x128xf32, #tpu.memory_space<vmem>>, vector<1x1x128xf32>
      %20 = vector.shape_cast %19 : vector<1x1x128xf32> to vector<1x128xf32>
      %21 = vector.shape_cast %18 : vector<1x128xf32> to vector<1x1x128xf32>
      tpu.vector_store %arg4[%c0_8, %c0_9, %c0_10], %21 {strides = array<i32>} : memref<1x3x128xf32, #tpu.memory_space<vmem>>, vector<1x1x128xf32>,
      %c0_11 = arith.constant 0 : index
      %c0_12 = arith.constant 0 : index
      %22 = vector.load %arg6[%c0_11, %c0_12] : memref<4x128xf32, #tpu.memory_space<vmem>>, vector<4x128xf32>
      %cst_13 = arith.constant dense<0.000000e+00> : vector<128xf32>
      %23 = vector.multi_reduction <add>, %22, %cst_13 [0] : vector<4x128xf32> to vector<128xf32>
      %24 = vector.shape_cast %23 : vector<128xf32> to vector<1x128xf32>
      %c0_14 = arith.constant 0 : index
      %c1 = arith.constant 1 : index
      %c0_15 = arith.constant 0 : index
      %25 = vector.load %arg4[%c0_14, %c1, %c0_15] : memref<1x3x128xf32, #tpu.memory_space<vmem>>, vector<1x1x128xf32>
      %26 = vector.shape_cast %25 : vector<1x1x128xf32> to vector<1x128xf32>
      %27 = vector.shape_cast %24 : vector<1x128xf32> to vector<1x1x128xf32>
      tpu.vector_store %arg4[%c0_14, %c1, %c0_15], %27 {strides = array<i32>} : memref<1x3x128xf32, #tpu.memory_space<vmem>>, vector<1x1x128xf32>,
      %c0_16 = arith.constant 0 : index
      %c0_17 = arith.constant 0 : index
      %28 = vector.load %arg7[%c0_16, %c0_17] : memref<4x128xf32, #tpu.memory_space<vmem>>, vector<4x128xf32>
      %cst_18 = arith.constant dense<0.000000e+00> : vector<128xf32>
      %29 = vector.multi_reduction <add>, %28, %cst_18 [0] : vector<4x128xf32> to vector<128xf32>
      %30 = vector.shape_cast %29 : vector<128xf32> to vector<1x128xf32>
      %c0_19 = arith.constant 0 : index
      %c2 = arith.constant 2 : index
      %c0_20 = arith.constant 0 : index
      %31 = vector.load %arg4[%c0_19, %c2, %c0_20] : memref<1x3x128xf32, #tpu.memory_space<vmem>>, vector<1x1x128xf32>
      %32 = vector.shape_cast %31 : vector<1x1x128xf32> to vector<1x128xf32>
      %33 = vector.shape_cast %30 : vector<1x128xf32> to vector<1x1x128xf32>
      tpu.vector_store %arg4[%c0_19, %c2, %c0_20], %33 {strides = array<i32>} : memref<1x3x128xf32, #tpu.memory_space<vmem>>, vector<1x1x128xf32>,
    } else {
    }
    return
  }
  func.func @transform_0(%arg0: i32, %arg1: i32) -> (i32, i32) {
    %c1_i32 = arith.constant 1 : i32
    %0 = arith.muli %arg0, %c1_i32 : i32
    %1 = arith.addi %0, %arg1 : i32
    %c0_i32 = arith.constant 0 : i32
    %2 = arith.minsi %1, %c0_i32 : i32
    %c0_i32_0 = arith.constant 0 : i32
    %c0_i32_1 = arith.constant 0 : i32
    return %2, %c0_i32_0 : i32, i32
  }
  func.func @transform_1(%arg0: i32, %arg1: i32) -> (i32, i32) {
    %c1_i32 = arith.constant 1 : i32
    %0 = arith.muli %arg0, %c1_i32 : i32
    %1 = arith.addi %0, %arg1 : i32
    %c0_i32 = arith.constant 0 : i32
    %2 = arith.minsi %1, %c0_i32 : i32
    %c0_i32_0 = arith.constant 0 : i32
    %c0_i32_1 = arith.constant 0 : i32
    return %2, %c0_i32_0 : i32, i32
  }
  func.func @transform_2(%arg0: i32, %arg1: i32) -> (i32, i32, i32) {
    %c0_i32 = arith.constant 0 : i32
    %c0_i32_0 = arith.constant 0 : i32
    %c0_i32_1 = arith.constant 0 : i32
    return %arg0, %c0_i32, %c0_i32_0 : i32, i32, i32
  }
}

</mosaic_0001>

<llo_original>
// kernel: tpu_custom_call.1
$region0: #{tpu_custom_call.1}
  #allocation0 [shape = 'u32[]', space=smem, size = 0x4, offset = 0x4, fixed_abs, tag = 'smem constant byte address 0x4 - core index']
  #allocation1 [shape = 'u32[144,128]{1,0:T(1,128)}', space=vmem, size = 0x12000, scoped, tag = 'internal scratch']
  #allocation2 [shape = 'f32[4,128]{1,0:T(4,128)}', space=vmem, size = 0x800, scoped, tag = 'scratch operand']
  #allocation3 [shape = 'f32[4,128]{1,0:T(4,128)}', space=vmem, size = 0x800, scoped, tag = 'scratch operand']
  #allocation4 [shape = 'f32[4,128]{1,0:T(4,128)}', space=vmem, size = 0x800, scoped, tag = 'scratch operand']
  %s0 = inlined_call_operand.hbm [shape: f32[4,128], index: 0, kind: input, shape index: {}]
  %s1 = inlined_call_operand.hbm [shape: f32[4,128], index: 1, kind: input, shape index: {}]
  %s2 = inlined_call_operand.vmem [shape: f32[1,3,128], index: 2, kind: output, shape index: {}]
  %s3 = sld [smem:[#allocation0]]
  $region42: #{tpu_custom_call.1} parent=0
    _
  %s5 = ssub.s32 1, %s3
  %s6 = scalar_select 0, %s5, %s3
  $region1: #{tpu_custom_call.1} parent=0
    #allocation5 [shape = 'u8[2048]{0}', space=vmem, size = 0x800, scoped, tag = 'input window, operand 0, single buffered']
    #allocation6 [shape = 's32[1]{0}', space=sflag, size = 0x4, scoped, tag = 'scoped memory for tpu_custom_call.1']
    #allocation7 [shape = 'u8[2048]{0}', space=vmem, size = 0x800, scoped, tag = 'input window, operand 1, single buffered']
    #allocation8 [shape = 's32[1]{0}', space=sflag, size = 0x4, scoped, tag = 'scoped memory for tpu_custom_call.1']
    %7 = vsyncpa [#allocation6], 0
    %8 = vsyncpa [#allocation8], 0
    // Predicated region
    $region2: #{tpu_custom_call.1} parent=1 // pred_check
      _
    $region3: #{tpu_custom_call.1} parent=1 // pred_check_branch
      %10 = sbr.rel (0) target = $region5
    $region4: #{tpu_custom_call.1} parent=1 // pred_region
      %s11 = sadd.s32 0, 0
      %p12 = scmp.lt.s32.totalorder %s11, 0
      %s13 = scalar_select %p12, %s11, 0
      %s15 = ssub.s32 64, 64
      %16 = vsyncadd [#allocation6], %s15
      %s17 = smul.addr %s13, 64
      %s18 = scalar_lea.hbm %s0, %s17
      %s20 = sshll.u32 [#allocation5], 4
      %s21 = int_to_ptr.vmem [resolvable:$true] %s20
      %23 = dma.hbm_to_vmem [thread:$0]  %s18, 64, %s21, [#allocation6]
    $region5: #{tpu_custom_call.1} parent=1 // pred_fallthru
      _
    // Predicated region
    $region6: #{tpu_custom_call.1} parent=1 // pred_check
      _
    $region7: #{tpu_custom_call.1} parent=1 // pred_check_branch
      %25 = sbr.rel (0) target = $region9
    $region8: #{tpu_custom_call.1} parent=1 // pred_region
      %s26 = sadd.s32 0, 0
      %p27 = scmp.lt.s32.totalorder %s26, 0
      %s28 = scalar_select %p27, %s26, 0
      %s30 = ssub.s32 64, 64
      %31 = vsyncadd [#allocation8], %s30
      %s32 = smul.addr %s28, 64
      %s33 = scalar_lea.hbm %s1, %s32
      %s35 = sshll.u32 [#allocation7], 4
      %s36 = int_to_ptr.vmem [resolvable:$true] %s35
      %38 = dma.hbm_to_vmem [thread:$0]  %s33, 64, %s36, [#allocation8]
    $region9: #{tpu_custom_call.1} parent=1 // pred_fallthru
      _
    // Predicated region
    $region10: #{tpu_custom_call.1} parent=1 // pred_check
      _
    $region11: #{tpu_custom_call.1} parent=1 // pred_check_branch
      %40 = sbr.rel (0) target = $region13
    $region12: #{tpu_custom_call.1} parent=1 // pred_region
      %41 = dma.done [#allocation6], 64
    $region13: #{tpu_custom_call.1} parent=1 // pred_fallthru
      _
    // Predicated region
    $region14: #{tpu_custom_call.1} parent=1 // pred_check
      _
    $region15: #{tpu_custom_call.1} parent=1 // pred_check_branch
      %43 = sbr.rel (0) target = $region17
    $region16: #{tpu_custom_call.1} parent=1 // pred_region
      %44 = dma.done [#allocation8], 64
    $region17: #{tpu_custom_call.1} parent=1 // pred_fallthru
      _
    %s45 = sadd.s32 0, 0
    %p46 = scmp.lt.s32.totalorder %s45, 0
    %s47 = scalar_select %p46, %s45, 0
    %s48 = sadd.s32 0, 0
    %p49 = scmp.lt.s32.totalorder %s48, 0
    %s50 = scalar_select %p49, %s48, 0
    %p51 = scmp.eq.s32.totalorder 0, 0
    // Predicated region
    $region18: #{tpu_custom_call.1} parent=1 // pred_check
      %p52 = pneg %p51
    $region19: #{tpu_custom_call.1} parent=1 // pred_check_branch
      %54 = sbr.rel (%p52) target = $region21
    $region20: #{tpu_custom_call.1} parent=1 // pred_region
      %55 = vst [vmem:[#allocation2] sm:$0xf] 0.0
      %56 = vst [vmem:[#allocation3] sm:$0xf] 0.0
      %57 = vst [vmem:[#allocation4] sm:$0xf] 0.0
    $region21: #{tpu_custom_call.1} parent=1 // pred_fallthru
      _
    %s58 = sadd.s32 0, 0
    %s59 = smul.u32 %s58, 4
    %s60 = sadd.s32 %s59, 4
    %p61 = scmp.le.s32.totalorder %s60, 4
    // Predicated region
    $region22: #{tpu_custom_call.1} parent=1 // pred_check
      %p62 = pneg %p61
    $region23: #{tpu_custom_call.1} parent=1 // pred_check_branch
      %64 = sbr.rel (%p62) target = $region25
    $region24: #{tpu_custom_call.1} parent=1 // pred_region
      %v65 = vld [vmem:[#allocation5] sm:$0xf]
      %v66 = vld [vmem:[#allocation7] sm:$0xf]
      %vm67 = vcmp.gt.f32.partialorder %v66, 0.0
      %vm68 = vcmp.lt.f32.partialorder %v66, 1.0
      %vm69 = vmand %vm67, %vm68
      %v70 = vlog2.pop %v65
      %v71 = vmul.f32 %v70, 0.6931472
      %v72 = vlog2.pop %v66
      %v73 = vmul.f32 %v72, 0.6931472
      %v74 = vsub.f32 %v71, %v73
      %v75 = vsel %vm69, %v74, 0.0
      %v76 = vld [vmem:[#allocation2] sm:$0xf]
      %v77 = vadd.f32 %v76, %v75
      %78 = vst [vmem:[#allocation2] sm:$0xf] %v77
      %v79 = vld [vmem:[#allocation3] sm:$0xf]
      %v80 = vmul.f32 %v75, %v75
      %v81 = vadd.f32 %v79, %v80
      %82 = vst [vmem:[#allocation3] sm:$0xf] %v81
      %v83 = vld [vmem:[#allocation4] sm:$0xf]
      %v84 = vsel %vm69, 1, 0
      %v85 = vcvt.s32.f32 %v84
      %v86 = vadd.f32 %v83, %v85
      %87 = vst [vmem:[#allocation4] sm:$0xf] %v86
    $region25: #{tpu_custom_call.1} parent=1 // pred_fallthru
      _
    %p88 = scmp.gt.s32.totalorder %s60, 4
    // Predicated region
    $region26: #{tpu_custom_call.1} parent=1 // pred_check
      %p89 = pneg %p88
    $region27: #{tpu_custom_call.1} parent=1 // pred_check_branch
      %91 = sbr.rel (%p89) target = $region29
    $region28: #{tpu_custom_call.1} parent=1 // pred_region
      %v92 = vld [vmem:[#allocation5] sm:$0xf]
      %v93 = vld [vmem:[#allocation7] sm:$0xf]
      %v94 = vlaneseq
      %v95 = vshrl.u32 %v94, 7
      %s96 = sadd.s32 %s59, 0
      %v97 = vstv %s96
      %v98 = vadd.s32 %v95, %v97
      %vm99 = vcmp.gt.f32.partialorder %v93, 0.0
      %vm100 = vcmp.lt.f32.partialorder %v93, 1.0
      %vm101 = vmand %vm99, %vm100
      %vm102 = vcmp.lt.s32.totalorder %v98, 4
      %vm103 = vmand %vm101, %vm102
      %v104 = vlog2.pop %v92
      %v105 = vmul.f32 %v104, 0.6931472
      %v106 = vlog2.pop %v93
      %v107 = vmul.f32 %v106, 0.6931472
      %v108 = vsub.f32 %v105, %v107
      %v109 = vsel %vm103, %v108, 0.0
      %v110 = vld [vmem:[#allocation2] sm:$0xf]
      %v111 = vadd.f32 %v110, %v109
      %112 = vst [vmem:[#allocation2] sm:$0xf] %v111
      %v113 = vld [vmem:[#allocation3] sm:$0xf]
      %v114 = vmul.f32 %v109, %v109
      %v115 = vadd.f32 %v113, %v114
      %116 = vst [vmem:[#allocation3] sm:$0xf] %v115
      %v117 = vld [vmem:[#allocation4] sm:$0xf]
      %v118 = vsel %vm103, 1, 0
      %v119 = vcvt.s32.f32 %v118
      %v120 = vadd.f32 %v117, %v119
      %121 = vst [vmem:[#allocation4] sm:$0xf] %v120
    $region29: #{tpu_custom_call.1} parent=1 // pred_fallthru
      _
    // Predicated region
    $region30: #{tpu_custom_call.1} parent=1 // pred_check
      %p122 = pneg %p51
    $region31: #{tpu_custom_call.1} parent=1 // pred_check_branch
      %124 = sbr.rel (%p122) target = $region33
    $region32: #{tpu_custom_call.1} parent=1 // pred_region
      %v125 = vld [vmem:[#allocation2] sm:$0xf]
      %vm126 = vcmask 1043456
      %v127 = vsel %vm126, %v125, 0.0
      %v128 = vrot.slane %v127, 4
      %v129 = vadd.f32 %v127, %v128
      %v130 = vrot.slane %v129, 2
      %v131 = vadd.f32 %v129, %v130
      %v132 = vrot.slane %v131, 1
      %v133 = vadd.f32 %v131, %v132
      %134 = vst [vmem:[%s2] sm:$0x1] %v133
      %v135 = vld [vmem:[#allocation3] sm:$0xf]
      %v136 = vsel %vm126, %v135, 0.0
      %v137 = vrot.slane %v136, 4
      %v138 = vadd.f32 %v136, %v137
      %v139 = vrot.slane %v138, 2
      %v140 = vadd.f32 %v138, %v139
      %v141 = vrot.slane %v140, 1
      %v142 = vadd.f32 %v140, %v141
      %143 = vst [vmem:[%s2 + $0x1] sm:$0x1] %v142
      %v144 = vld [vmem:[#allocation4] sm:$0xf]
      %v145 = vsel %vm126, %v144, 0.0
      %v146 = vrot.slane %v145, 4
      %v147 = vadd.f32 %v145, %v146
      %v148 = vrot.slane %v147, 2
      %v149 = vadd.f32 %v147, %v148
      %v150 = vrot.slane %v149, 1
      %v151 = vadd.f32 %v149, %v150
      %152 = vst [vmem:[%s2 + $0x2] sm:$0x1] %v151
    $region33: #{tpu_custom_call.1} parent=1 // pred_fallthru
      _
    // Predicated region
    $region34: #{tpu_custom_call.1} parent=1 // pred_check
      _
    $region35: #{tpu_custom_call.1} parent=1 // pred_check_branch
      %154 = sbr.rel (0) target = $region37
    $region36: #{tpu_custom_call.1} parent=1 // pred_region
      _
    $region37: #{tpu_custom_call.1} parent=1 // pred_fallthru
      _
    // Predicated region
    $region38: #{tpu_custom_call.1} parent=1 // pred_check
      _
    $region39: #{tpu_custom_call.1} parent=1 // pred_check_branch
      %156 = sbr.rel (0) target = $region41
    $region40: #{tpu_custom_call.1} parent=1 // pred_region
      _
    $region41: #{tpu_custom_call.1} parent=1 // pred_fallthru
      _
    %157 = vsyncpa [#allocation6], 1
    %158 = vsyncpa [#allocation8], 1

</llo_original>
